<compile_context>
chip_gen: v6e
topology: v6e:2x2x1
jax: 0.10.0
libtpu: 0.0.40
codegen_flags: <defaults>
</compile_context>

<pallas_src>
import functools

import jax
import jax.numpy as jnp
from jax.experimental import pallas as pl
from jax.experimental.pallas import tpu as pltpu

LANES = 128
SUBLANES = 8
GROUP_ROWS = 256        # rows folded per inner-loop step (128 KiB f32 temporaries)
MAX_TILE_ROWS = 4096    # 4096 x 128 f32 = 2 MiB/block; 2 inputs x 2 bufs = 8 MiB VMEM
NUM_SHARDS = 2          # leading "parallel" grid axis; both TensorCores on v7x
VMEM_LIMIT_BYTES = 32 * 1024 * 1024


def _round_up(x, m):
    return (x + m - 1) // m * m


def _pearson_kernel(g_ref, p_ref, o_ref, *, n_rows, n_blocks, steps_per_shard,
                    tile_r, group, ragged, needs_skip):
    """Accumulate 5 (8,128) partial-sum tiles per shard into o_ref.

    o_ref block: f32[1, 5, 8, 128] = per-(sublane, lane) partial sums of
    [p, g, p*p, g*g, p*g] for this shard, accumulated across the arbitrary
    grid axis. The wrapper combines shards and finalizes the scalar.
    """
    s = pl.program_id(0)
    i = pl.program_id(1)
    logical = s * steps_per_shard + i          # logical block index (may exceed n_blocks-1)

    @pl.when(i == 0)
    def _init():
        o_ref[...] = jnp.zeros_like(o_ref)

    n_groups = tile_r // group

    def fold(x):
        # (group, 128) -> (8, 128) partial sums: pure VPU adds over whole
        # (8,128) tiles (no cross-lane work, reshape does not cross tiles).
        return jnp.sum(x.reshape(group // SUBLANES, SUBLANES, LANES), axis=0)

    def accumulate(masked):
        # Bounded-size inner loop: temporaries stay at GROUP_ROWS x 128
        # regardless of the block size (keeps vregs / VMEM pressure flat).
        def body(r, carry):
            sp, sg, spp, sgg, spg = carry
            r0 = pl.multiple_of(r * group, group)
            pv = p_ref[pl.ds(r0, group), :].astype(jnp.float32)
            gv = g_ref[pl.ds(r0, group), :].astype(jnp.float32)
            if masked:
                # Zero invalid rows BEFORE products (block padding is garbage).
                row = jax.lax.broadcasted_iota(jnp.int32, (group, LANES), 0)
                valid = (row + (logical * tile_r + r * group)) < n_rows
                pv = jnp.where(valid, pv, 0.0)
                gv = jnp.where(valid, gv, 0.0)
            return (sp + fold(pv), sg + fold(gv), spp + fold(pv * pv),
                    sgg + fold(gv * gv), spg + fold(pv * gv))

        z = jnp.zeros((SUBLANES, LANES), jnp.float32)
        sp, sg, spp, sgg, spg = jax.lax.fori_loop(
            0, n_groups, body, (z, z, z, z, z))
        o_ref[0, 0] += sp
        o_ref[0, 1] += sg
        o_ref[0, 2] += spp
        o_ref[0, 3] += sgg
        o_ref[0, 4] += spg

    if ragged:
        # Only the last logical block can contain rows past the end of the
        # array -> mask only that block; skip fully-padded tail blocks.
        @pl.when(logical < n_blocks - 1)
        def _interior():
            accumulate(masked=False)

        @pl.when(logical == n_blocks - 1)
        def _edge():
            accumulate(masked=True)
    elif needs_skip:
        # Blocks are full, but the block count doesn't divide by the shard
        # count -> skip the padded tail logical blocks.
        @pl.when(logical < n_blocks)
        def _valid():
            accumulate(masked=False)
    else:
        accumulate(masked=False)


def _prep(x):
    """Flatten to a lane-dense (rows, 128) slab (native dtype, cast in-kernel).

    Only zero-pads (full-array copy) when the element count is not a multiple
    of 128; zero padding does not perturb any of the accumulated sums.
    """
    flat = jnp.ravel(x)
    n = int(flat.shape[0])
    pad = (-n) % LANES
    if pad:
        flat = jnp.pad(flat, (0, pad))
    return flat.reshape(-1, LANES), n


def calculate_pearson_correlation(gender_labels, predictions):
    g_slab, n_g = _prep(gender_labels)
    p_slab, n_p = _prep(predictions)
    assert n_g == n_p, "gender_labels and predictions must have equal size"
    n_valid = n_g
    rows = g_slab.shape[0]

    # Big row tiles for HBM throughput; always a multiple of GROUP_ROWS so the
    # inner group loop has a static trip count (and covers bf16/int8 packing).
    tile_r = min(MAX_TILE_ROWS, _round_up(rows, GROUP_ROWS))
    group = GROUP_ROWS
    assert tile_r % group == 0

    n_blocks = pl.cdiv(rows, tile_r)
    ragged = (rows % tile_r) != 0
    num_shards = NUM_SHARDS if n_blocks >= 2 else 1
    steps_per_shard = pl.cdiv(n_blocks, num_shards)
    needs_skip = (num_shards * steps_per_shard) != n_blocks
    grid = (num_shards, steps_per_shard)

    def in_map(s, i):
        # Clamp so a padded tail logical block never points outside the array
        # (the kernel skips its accumulation anyway).
        return (jnp.minimum(s * steps_per_shard + i, n_blocks - 1), 0)

    kernel = functools.partial(
        _pearson_kernel,
        n_rows=rows,
        n_blocks=n_blocks,
        steps_per_shard=steps_per_shard,
        tile_r=tile_r,
        group=group,
        ragged=ragged,
        needs_skip=needs_skip,
    )

    bytes_accessed = n_valid * (gender_labels.dtype.itemsize
                                + predictions.dtype.itemsize)
    cost = pl.CostEstimate(flops=8 * n_valid, transcendentals=0,
                           bytes_accessed=bytes_accessed)

    moments = pl.pallas_call(
        kernel,
        out_shape=jax.ShapeDtypeStruct((num_shards, 5, SUBLANES, LANES),
                                       jnp.float32),
        grid_spec=pltpu.PrefetchScalarGridSpec(
            num_scalar_prefetch=0,
            grid=grid,
            in_specs=[
                pl.BlockSpec((tile_r, LANES), in_map),
                pl.BlockSpec((tile_r, LANES), in_map),
            ],
            out_specs=pl.BlockSpec((1, 5, SUBLANES, LANES),
                                   lambda s, i: (s, 0, 0, 0)),
        ),
        compiler_params=pltpu.CompilerParams(
            dimension_semantics=("parallel", "arbitrary"),
            vmem_limit_bytes=VMEM_LIMIT_BYTES,
        ),
        cost_estimate=cost,
    )(g_slab, p_slab)

    # Combine per-shard / per-(sublane,lane) partial sums and finalize (cheap
    # scalar epilogue; also where v7x's two-core partials are merged).
    sums = jnp.sum(moments, axis=(0, 2, 3))
    sp, sg, spp, sgg, spg = sums[0], sums[1], sums[2], sums[3], sums[4]

    n = jnp.float32(n_valid)
    p_mean = sp / n
    g_mean = sg / n
    # mean((p - p_mean) * (g - g_mean))  (population / N denominator)
    covariance = spg / n - p_mean * g_mean
    # torch.std -> unbiased (N-1 denominator). NOTE: n == 1 gives NaN,
    # matching torch.std of a single element.
    p_var = (spp - sp * sp / n) / (n - 1.0)
    g_var = (sgg - sg * sg / n) / (n - 1.0)
    corr = covariance / (jnp.sqrt(p_var) * jnp.sqrt(g_var) + 1e-6)
    return corr * corr  # scalar, matching the PyTorch module's scalar output


def _reference(gender_labels, predictions):
    g = gender_labels.astype(jnp.float32).ravel()
    p = predictions.astype(jnp.float32).ravel()
    pm = jnp.mean(p)
    gm = jnp.mean(g)
    cov = jnp.mean((p - pm) * (g - gm))
    p_std = jnp.std(p, ddof=1)
    g_std = jnp.std(g, ddof=1)
    corr = cov / (p_std * g_std + 1e-6)
    return corr**2


if __name__ == "__main__":
    key = jax.random.PRNGKey(0)
    keys = jax.random.split(key, 6)

    # Test 1: lane-aligned small shape (2048 elements) -> single masked block.
    gender_labels = (jax.random.uniform(keys[0], (2, 4, 16, 16)) > 0.5).astype(jnp.float32)
    predictions = jax.random.normal(keys[1], (2, 4, 16, 16), dtype=jnp.float32)
    result = jax.block_until_ready(calculate_pearson_correlation(gender_labels, predictions))
    ref = _reference(gender_labels, predictions)
    assert jnp.allclose(result, ref, rtol=1e-4, atol=1e-6), (result, ref)

    # Test 2: ragged small shape (2400 elements) -> lane pad + masked edge block.
    gender_labels2 = (jax.random.uniform(keys[2], (4, 600)) > 0.5).astype(jnp.float32)
    predictions2 = jax.random.normal(keys[3], (4, 600), dtype=jnp.float32)
    result2 = jax.block_until_ready(calculate_pearson_correlation(gender_labels2, predictions2))
    ref2 = _reference(gender_labels2, predictions2)
    assert jnp.allclose(result2, ref2, rtol=1e-4, atol=1e-6), (result2, ref2)

    # Test 3: moderate ragged shape (~1.05M elements) -> multiple 4096-row
    # blocks, 2-shard parallel axis, clamped/skipped tail block, masked edge.
    gender_labels3 = (jax.random.uniform(keys[4], (257, 4097)) > 0.5).astype(jnp.float32)
    predictions3 = jax.random.normal(keys[5], (257, 4097), dtype=jnp.float32)
    result3 = jax.block_until_ready(calculate_pearson_correlation(gender_labels3, predictions3))
    ref3 = _reference(gender_labels3, predictions3)
    assert jnp.allclose(result3, ref3, rtol=1e-4, atol=1e-6), (result3, ref3)

    print("KERNEL_OK")
</pallas_src>

<mosaic_0001>
module attributes {stable_mosaic.version = 11 : i64} {
  func.func @_pearson_kernel(%arg0: i32, %arg1: i32, %arg2: memref<256x128xf32, #tpu.memory_space<vmem>>, %arg3: memref<256x128xf32, #tpu.memory_space<vmem>>, %arg4: memref<1x5x8x128xf32, #tpu.memory_space<vmem>>) attributes {dimension_semantics = [#tpu.dimension_semantics<parallel>, #tpu.dimension_semantics<arbitrary>], iteration_bounds = array<i64: 1, 1>, scalar_prefetch = 0 : i64, scratch_operands = 0 : i64, tpu.core_type = #tpu.core_type<tc>, window_params = [{transform_indices = @transform_0, window_bounds = array<i64: 256, 128>}, {transform_indices = @transform_1, window_bounds = array<i64: 256, 128>}, {transform_indices = @transform_2, window_bounds = array<i64: 1, 5, 8, 128>}]} {
    %c1_i32 = arith.constant 1 : i32
    %0 = arith.muli %arg0, %c1_i32 : i32
    %1 = arith.addi %0, %arg1 : i32
    %c0_i32 = arith.constant 0 : i32
    %2 = arith.cmpi eq, %arg1, %c0_i32 : i32
    %3 = arith.extui %2 : i1 to i32
    %c0_i32_0 = arith.constant 0 : i32
    %4 = arith.cmpi ne, %3, %c0_i32_0 : i32
    scf.if %4 {
      %cst = arith.constant 0.000000e+00 : f32
      %11 = vector.broadcast %cst : f32 to vector<1x5x8x128xf32>
      %c0 = arith.constant 0 : index
      %c0_5 = arith.constant 0 : index
      %c0_6 = arith.constant 0 : index
      %c0_7 = arith.constant 0 : index
      %12 = vector.load %arg4[%c0, %c0_5, %c0_6, %c0_7] : memref<1x5x8x128xf32, #tpu.memory_space<vmem>>, vector<1x5x8x128xf32>
      tpu.vector_store %arg4[%c0, %c0_5, %c0_6, %c0_7], %11 {strides = array<i32>} : memref<1x5x8x128xf32, #tpu.memory_space<vmem>>, vector<1x5x8x128xf32>,
    } else {
    }
    %c0_i32_1 = arith.constant 0 : i32
    %5 = arith.cmpi slt, %1, %c0_i32_1 : i32
    %6 = arith.extui %5 : i1 to i32
    %c0_i32_2 = arith.constant 0 : i32
    %7 = arith.cmpi ne, %6, %c0_i32_2 : i32
    scf.if %7 {
      %cst = arith.constant 0.000000e+00 : f32
      %11 = vector.broadcast %cst : f32 to vector<8x128xf32>
      %c0_i32_5 = arith.constant 0 : i32
      %c256_i32 = arith.constant 256 : i32
      %12 = arith.muli %c0_i32_5, %c256_i32 : i32
      %13 = tpu.assume_multiple %12, 256 : i32
      %14 = arith.index_cast %13 : i32 to index
      %c0 = arith.constant 0 : index
      %15 = vector.load %arg3[%14, %c0] : memref<256x128xf32, #tpu.memory_space<vmem>>, vector<256x128xf32>
      %16 = arith.index_cast %13 : i32 to index
      %c0_6 = arith.constant 0 : index
      %17 = vector.load %arg2[%16, %c0_6] : memref<256x128xf32, #tpu.memory_space<vmem>>, vector<256x128xf32>
      %18 = vector.shape_cast %15 : vector<256x128xf32> to vector<32x8x128xf32>
      %cst_7 = arith.constant dense<0.000000e+00> : vector<8x128xf32>
      %19 = vector.multi_reduction <add>, %18, %cst_7 [0] : vector<32x8x128xf32> to vector<8x128xf32>
      %20 = arith.addf %11, %19 : vector<8x128xf32>
      %21 = vector.shape_cast %17 : vector<256x128xf32> to vector<32x8x128xf32>
      %cst_8 = arith.constant dense<0.000000e+00> : vector<8x128xf32>
      %22 = vector.multi_reduction <add>, %21, %cst_8 [0] : vector<32x8x128xf32> to vector<8x128xf32>
      %23 = arith.addf %11, %22 : vector<8x128xf32>
      %24 = arith.mulf %15, %15 : vector<256x128xf32>
      %25 = vector.shape_cast %24 : vector<256x128xf32> to vector<32x8x128xf32>
      %cst_9 = arith.constant dense<0.000000e+00> : vector<8x128xf32>
      %26 = vector.multi_reduction <add>, %25, %cst_9 [0] : vector<32x8x128xf32> to vector<8x128xf32>
      %27 = arith.addf %11, %26 : vector<8x128xf32>
      %28 = arith.mulf %17, %17 : vector<256x128xf32>
      %29 = vector.shape_cast %28 : vector<256x128xf32> to vector<32x8x128xf32>
      %cst_10 = arith.constant dense<0.000000e+00> : vector<8x128xf32>
      %30 = vector.multi_reduction <add>, %29, %cst_10 [0] : vector<32x8x128xf32> to vector<8x128xf32>
      %31 = arith.addf %11, %30 : vector<8x128xf32>
      %32 = arith.mulf %15, %17 : vector<256x128xf32>
      %33 = vector.shape_cast %32 : vector<256x128xf32> to vector<32x8x128xf32>
      %cst_11 = arith.constant dense<0.000000e+00> : vector<8x128xf32>
      %34 = vector.multi_reduction <add>, %33, %cst_11 [0] : vector<32x8x128xf32> to vector<8x128xf32>
      %35 = arith.addf %11, %34 : vector<8x128xf32>
      %c1_i32_12 = arith.constant 1 : i32
      %c0_13 = arith.constant 0 : index
      %c0_14 = arith.constant 0 : index
      %c0_15 = arith.constant 0 : index
      %c0_16 = arith.constant 0 : index
      %36 = vector.load %arg4[%c0_13, %c0_14, %c0_15, %c0_16] : memref<1x5x8x128xf32, #tpu.memory_space<vmem>>, vector<1x1x8x128xf32>
      %37 = vector.shape_cast %36 : vector<1x1x8x128xf32> to vector<8x128xf32>
      %38 = arith.addf %37, %20 : vector<8x128xf32>
      %c0_17 = arith.constant 0 : index
      %c0_18 = arith.constant 0 : index
      %c0_19 = arith.constant 0 : index
      %c0_20 = arith.constant 0 : index
      %39 = vector.load %arg4[%c0_17, %c0_18, %c0_19, %c0_20] : memref<1x5x8x128xf32, #tpu.memory_space<vmem>>, vector<1x1x8x128xf32>
      %40 = vector.shape_cast %39 : vector<1x1x8x128xf32> to vector<8x128xf32>
      %41 = vector.shape_cast %38 : vector<8x128xf32> to vector<1x1x8x128xf32>
      tpu.vector_store %arg4[%c0_17, %c0_18, %c0_19, %c0_20], %41 {strides = array<i32>} : memref<1x5x8x128xf32, #tpu.memory_space<vmem>>, vector<1x1x8x128xf32>,
      %c0_21 = arith.constant 0 : index
      %c1 = arith.constant 1 : index
      %c0_22 = arith.constant 0 : index
      %c0_23 = arith.constant 0 : index
      %42 = vector.load %arg4[%c0_21, %c1, %c0_22, %c0_23] : memref<1x5x8x128xf32, #tpu.memory_space<vmem>>, vector<1x1x8x128xf32>
      %43 = vector.shape_cast %42 : vector<1x1x8x128xf32> to vector<8x128xf32>
      %44 = arith.addf %43, %23 : vector<8x128xf32>
      %c0_24 = arith.constant 0 : index
      %c1_25 = arith.constant 1 : index
      %c0_26 = arith.constant 0 : index
      %c0_27 = arith.constant 0 : index
      %45 = vector.load %arg4[%c0_24, %c1_25, %c0_26, %c0_27] : memref<1x5x8x128xf32, #tpu.memory_space<vmem>>, vector<1x1x8x128xf32>
      %46 = vector.shape_cast %45 : vector<1x1x8x128xf32> to vector<8x128xf32>
      %47 = vector.shape_cast %44 : vector<8x128xf32> to vector<1x1x8x128xf32>
      tpu.vector_store %arg4[%c0_24, %c1_25, %c0_26, %c0_27], %47 {strides = array<i32>} : memref<1x5x8x128xf32, #tpu.memory_space<vmem>>, vector<1x1x8x128xf32>,
      %c0_28 = arith.constant 0 : index
      %c2 = arith.constant 2 : index
      %c0_29 = arith.constant 0 : index
      %c0_30 = arith.constant 0 : index
      %48 = vector.load %arg4[%c0_28, %c2, %c0_29, %c0_30] : memref<1x5x8x128xf32, #tpu.memory_space<vmem>>, vector<1x1x8x128xf32>
      %49 = vector.shape_cast %48 : vector<1x1x8x128xf32> to vector<8x128xf32>
      %50 = arith.addf %49, %27 : vector<8x128xf32>
      %c0_31 = arith.constant 0 : index
      %c2_32 = arith.constant 2 : index
      %c0_33 = arith.constant 0 : index
      %c0_34 = arith.constant 0 : index
      %51 = vector.load %arg4[%c0_31, %c2_32, %c0_33, %c0_34] : memref<1x5x8x128xf32, #tpu.memory_space<vmem>>, vector<1x1x8x128xf32>
      %52 = vector.shape_cast %51 : vector<1x1x8x128xf32> to vector<8x128xf32>
      %53 = vector.shape_cast %50 : vector<8x128xf32> to vector<1x1x8x128xf32>
      tpu.vector_store %arg4[%c0_31, %c2_32, %c0_33, %c0_34], %53 {strides = array<i32>} : memref<1x5x8x128xf32, #tpu.memory_space<vmem>>, vector<1x1x8x128xf32>,
      %c0_35 = arith.constant 0 : index
      %c3 = arith.constant 3 : index
      %c0_36 = arith.constant 0 : index
      %c0_37 = arith.constant 0 : index
      %54 = vector.load %arg4[%c0_35, %c3, %c0_36, %c0_37] : memref<1x5x8x128xf32, #tpu.memory_space<vmem>>, vector<1x1x8x128xf32>
      %55 = vector.shape_cast %54 : vector<1x1x8x128xf32> to vector<8x128xf32>
      %56 = arith.addf %55, %31 : vector<8x128xf32>
      %c0_38 = arith.constant 0 : index
      %c3_39 = arith.constant 3 : index
      %c0_40 = arith.constant 0 : index
      %c0_41 = arith.constant 0 : index
      %57 = vector.load %arg4[%c0_38, %c3_39, %c0_40, %c0_41] : memref<1x5x8x128xf32, #tpu.memory_space<vmem>>, vector<1x1x8x128xf32>
      %58 = vector.shape_cast %57 : vector<1x1x8x128xf32> to vector<8x128xf32>
      %59 = vector.shape_cast %56 : vector<8x128xf32> to vector<1x1x8x128xf32>
      tpu.vector_store %arg4[%c0_38, %c3_39, %c0_40, %c0_41], %59 {strides = array<i32>} : memref<1x5x8x128xf32, #tpu.memory_space<vmem>>, vector<1x1x8x128xf32>,
      %c0_42 = arith.constant 0 : index
      %c4 = arith.constant 4 : index
      %c0_43 = arith.constant 0 : index
      %c0_44 = arith.constant 0 : index
      %60 = vector.load %arg4[%c0_42, %c4, %c0_43, %c0_44] : memref<1x5x8x128xf32, #tpu.memory_space<vmem>>, vector<1x1x8x128xf32>
      %61 = vector.shape_cast %60 : vector<1x1x8x128xf32> to vector<8x128xf32>
      %62 = arith.addf %61, %35 : vector<8x128xf32>
      %c0_45 = arith.constant 0 : index
      %c4_46 = arith.constant 4 : index
      %c0_47 = arith.constant 0 : index
      %c0_48 = arith.constant 0 : index
      %63 = vector.load %arg4[%c0_45, %c4_46, %c0_47, %c0_48] : memref<1x5x8x128xf32, #tpu.memory_space<vmem>>, vector<1x1x8x128xf32>
      %64 = vector.shape_cast %63 : vector<1x1x8x128xf32> to vector<8x128xf32>
      %65 = vector.shape_cast %62 : vector<8x128xf32> to vector<1x1x8x128xf32>
      tpu.vector_store %arg4[%c0_45, %c4_46, %c0_47, %c0_48], %65 {strides = array<i32>} : memref<1x5x8x128xf32, #tpu.memory_space<vmem>>, vector<1x1x8x128xf32>,
    } else {
    }
    %c0_i32_3 = arith.constant 0 : i32
    %8 = arith.cmpi eq, %1, %c0_i32_3 : i32
    %9 = arith.extui %8 : i1 to i32
    %c0_i32_4 = arith.constant 0 : i32
    %10 = arith.cmpi ne, %9, %c0_i32_4 : i32
    scf.if %10 {
      %cst = arith.constant 0.000000e+00 : f32
      %11 = vector.broadcast %cst : f32 to vector<8x128xf32>
      %c0_i32_5 = arith.constant 0 : i32
      %c256_i32 = arith.constant 256 : i32
      %12 = arith.muli %c0_i32_5, %c256_i32 : i32
      %13 = tpu.assume_multiple %12, 256 : i32
      %14 = arith.index_cast %13 : i32 to index
      %c0 = arith.constant 0 : index
      %15 = vector.load %arg3[%14, %c0] : memref<256x128xf32, #tpu.memory_space<vmem>>, vector<256x128xf32>
      %16 = arith.index_cast %13 : i32 to index
      %c0_6 = arith.constant 0 : index
      %17 = vector.load %arg2[%16, %c0_6] : memref<256x128xf32, #tpu.memory_space<vmem>>, vector<256x128xf32>
      %18 = tpu.iota {dimensions = array<i32: 0>} : vector<256x128xi32>
      %c256_i32_7 = arith.constant 256 : i32
      %19 = arith.muli %1, %c256_i32_7 : i32
      %c256_i32_8 = arith.constant 256 : i32
      %20 = arith.muli %c0_i32_5, %c256_i32_8 : i32
      %21 = arith.addi %19, %20 : i32
      %22 = vector.broadcast %21 : i32 to vector<256x128xi32>
      %23 = arith.addi %18, %22 : vector<256x128xi32>
      %c16_i32 = arith.constant 16 : i32
      %24 = vector.broadcast %c16_i32 : i32 to vector<256x128xi32>
      %25 = arith.cmpi slt, %23, %24 : vector<256x128xi32>
      %cst_9 = arith.constant 0.000000e+00 : f32
      %26 = vector.broadcast %cst_9 : f32 to vector<256x128xf32>
      %27 = arith.select %25, %15, %26 : vector<256x128xi1>, vector<256x128xf32>
      %cst_10 = arith.constant 0.000000e+00 : f32
      %28 = vector.broadcast %cst_10 : f32 to vector<256x128xf32>
      %29 = arith.select %25, %17, %28 : vector<256x128xi1>, vector<256x128xf32>
      %30 = vector.shape_cast %27 : vector<256x128xf32> to vector<32x8x128xf32>
      %cst_11 = arith.constant dense<0.000000e+00> : vector<8x128xf32>
      %31 = vector.multi_reduction <add>, %30, %cst_11 [0] : vector<32x8x128xf32> to vector<8x128xf32>
      %32 = arith.addf %11, %31 : vector<8x128xf32>
      %33 = vector.shape_cast %29 : vector<256x128xf32> to vector<32x8x128xf32>
      %cst_12 = arith.constant dense<0.000000e+00> : vector<8x128xf32>
      %34 = vector.multi_reduction <add>, %33, %cst_12 [0] : vector<32x8x128xf32> to vector<8x128xf32>
      %35 = arith.addf %11, %34 : vector<8x128xf32>
      %36 = arith.mulf %27, %27 : vector<256x128xf32>
      %37 = vector.shape_cast %36 : vector<256x128xf32> to vector<32x8x128xf32>
      %cst_13 = arith.constant dense<0.000000e+00> : vector<8x128xf32>
      %38 = vector.multi_reduction <add>, %37, %cst_13 [0] : vector<32x8x128xf32> to vector<8x128xf32>
      %39 = arith.addf %11, %38 : vector<8x128xf32>
      %40 = arith.mulf %29, %29 : vector<256x128xf32>
      %41 = vector.shape_cast %40 : vector<256x128xf32> to vector<32x8x128xf32>
      %cst_14 = arith.constant dense<0.000000e+00> : vector<8x128xf32>
      %42 = vector.multi_reduction <add>, %41, %cst_14 [0] : vector<32x8x128xf32> to vector<8x128xf32>
      %43 = arith.addf %11, %42 : vector<8x128xf32>
      %44 = arith.mulf %27, %29 : vector<256x128xf32>
      %45 = vector.shape_cast %44 : vector<256x128xf32> to vector<32x8x128xf32>
      %cst_15 = arith.constant dense<0.000000e+00> : vector<8x128xf32>
      %46 = vector.multi_reduction <add>, %45, %cst_15 [0] : vector<32x8x128xf32> to vector<8x128xf32>
      %47 = arith.addf %11, %46 : vector<8x128xf32>
      %c1_i32_16 = arith.constant 1 : i32
      %c0_17 = arith.constant 0 : index
      %c0_18 = arith.constant 0 : index
      %c0_19 = arith.constant 0 : index
      %c0_20 = arith.constant 0 : index
      %48 = vector.load %arg4[%c0_17, %c0_18, %c0_19, %c0_20] : memref<1x5x8x128xf32, #tpu.memory_space<vmem>>, vector<1x1x8x128xf32>
      %49 = vector.shape_cast %48 : vector<1x1x8x128xf32> to vector<8x128xf32>
      %50 = arith.addf %49, %32 : vector<8x128xf32>
      %c0_21 = arith.constant 0 : index
      %c0_22 = arith.constant 0 : index
      %c0_23 = arith.constant 0 : index
      %c0_24 = arith.constant 0 : index
      %51 = vector.load %arg4[%c0_21, %c0_22, %c0_23, %c0_24] : memref<1x5x8x128xf32, #tpu.memory_space<vmem>>, vector<1x1x8x128xf32>
      %52 = vector.shape_cast %51 : vector<1x1x8x128xf32> to vector<8x128xf32>
      %53 = vector.shape_cast %50 : vector<8x128xf32> to vector<1x1x8x128xf32>
      tpu.vector_store %arg4[%c0_21, %c0_22, %c0_23, %c0_24], %53 {strides = array<i32>} : memref<1x5x8x128xf32, #tpu.memory_space<vmem>>, vector<1x1x8x128xf32>,
      %c0_25 = arith.constant 0 : index
      %c1 = arith.constant 1 : index
      %c0_26 = arith.constant 0 : index
      %c0_27 = arith.constant 0 : index
      %54 = vector.load %arg4[%c0_25, %c1, %c0_26, %c0_27] : memref<1x5x8x128xf32, #tpu.memory_space<vmem>>, vector<1x1x8x128xf32>
      %55 = vector.shape_cast %54 : vector<1x1x8x128xf32> to vector<8x128xf32>
      %56 = arith.addf %55, %35 : vector<8x128xf32>
      %c0_28 = arith.constant 0 : index
      %c1_29 = arith.constant 1 : index
      %c0_30 = arith.constant 0 : index
      %c0_31 = arith.constant 0 : index
      %57 = vector.load %arg4[%c0_28, %c1_29, %c0_30, %c0_31] : memref<1x5x8x128xf32, #tpu.memory_space<vmem>>, vector<1x1x8x128xf32>
      %58 = vector.shape_cast %57 : vector<1x1x8x128xf32> to vector<8x128xf32>
      %59 = vector.shape_cast %56 : vector<8x128xf32> to vector<1x1x8x128xf32>
      tpu.vector_store %arg4[%c0_28, %c1_29, %c0_30, %c0_31], %59 {strides = array<i32>} : memref<1x5x8x128xf32, #tpu.memory_space<vmem>>, vector<1x1x8x128xf32>,
      %c0_32 = arith.constant 0 : index
      %c2 = arith.constant 2 : index
      %c0_33 = arith.constant 0 : index
      %c0_34 = arith.constant 0 : index
      %60 = vector.load %arg4[%c0_32, %c2, %c0_33, %c0_34] : memref<1x5x8x128xf32, #tpu.memory_space<vmem>>, vector<1x1x8x128xf32>
      %61 = vector.shape_cast %60 : vector<1x1x8x128xf32> to vector<8x128xf32>
      %62 = arith.addf %61, %39 : vector<8x128xf32>
      %c0_35 = arith.constant 0 : index
      %c2_36 = arith.constant 2 : index
      %c0_37 = arith.constant 0 : index
      %c0_38 = arith.constant 0 : index
      %63 = vector.load %arg4[%c0_35, %c2_36, %c0_37, %c0_38] : memref<1x5x8x128xf32, #tpu.memory_space<vmem>>, vector<1x1x8x128xf32>
      %64 = vector.shape_cast %63 : vector<1x1x8x128xf32> to vector<8x128xf32>
      %65 = vector.shape_cast %62 : vector<8x128xf32> to vector<1x1x8x128xf32>
      tpu.vector_store %arg4[%c0_35, %c2_36, %c0_37, %c0_38], %65 {strides = array<i32>} : memref<1x5x8x128xf32, #tpu.memory_space<vmem>>, vector<1x1x8x128xf32>,
      %c0_39 = arith.constant 0 : index
      %c3 = arith.constant 3 : index
      %c0_40 = arith.constant 0 : index
      %c0_41 = arith.constant 0 : index
      %66 = vector.load %arg4[%c0_39, %c3, %c0_40, %c0_41] : memref<1x5x8x128xf32, #tpu.memory_space<vmem>>, vector<1x1x8x128xf32>
      %67 = vector.shape_cast %66 : vector<1x1x8x128xf32> to vector<8x128xf32>
      %68 = arith.addf %67, %43 : vector<8x128xf32>
      %c0_42 = arith.constant 0 : index
      %c3_43 = arith.constant 3 : index
      %c0_44 = arith.constant 0 : index
      %c0_45 = arith.constant 0 : index
      %69 = vector.load %arg4[%c0_42, %c3_43, %c0_44, %c0_45] : memref<1x5x8x128xf32, #tpu.memory_space<vmem>>, vector<1x1x8x128xf32>
      %70 = vector.shape_cast %69 : vector<1x1x8x128xf32> to vector<8x128xf32>
      %71 = vector.shape_cast %68 : vector<8x128xf32> to vector<1x1x8x128xf32>
      tpu.vector_store %arg4[%c0_42, %c3_43, %c0_44, %c0_45], %71 {strides = array<i32>} : memref<1x5x8x128xf32, #tpu.memory_space<vmem>>, vector<1x1x8x128xf32>,
      %c0_46 = arith.constant 0 : index
      %c4 = arith.constant 4 : index
      %c0_47 = arith.constant 0 : index
      %c0_48 = arith.constant 0 : index
      %72 = vector.load %arg4[%c0_46, %c4, %c0_47, %c0_48] : memref<1x5x8x128xf32, #tpu.memory_space<vmem>>, vector<1x1x8x128xf32>
      %73 = vector.shape_cast %72 : vector<1x1x8x128xf32> to vector<8x128xf32>
      %74 = arith.addf %73, %47 : vector<8x128xf32>
      %c0_49 = arith.constant 0 : index
      %c4_50 = arith.constant 4 : index
      %c0_51 = arith.constant 0 : index
      %c0_52 = arith.constant 0 : index
      %75 = vector.load %arg4[%c0_49, %c4_50, %c0_51, %c0_52] : memref<1x5x8x128xf32, #tpu.memory_space<vmem>>, vector<1x1x8x128xf32>
      %76 = vector.shape_cast %75 : vector<1x1x8x128xf32> to vector<8x128xf32>
      %77 = vector.shape_cast %74 : vector<8x128xf32> to vector<1x1x8x128xf32>
      tpu.vector_store %arg4[%c0_49, %c4_50, %c0_51, %c0_52], %77 {strides = array<i32>} : memref<1x5x8x128xf32, #tpu.memory_space<vmem>>, vector<1x1x8x128xf32>,
    } else {
    }
    return
  }
  func.func @transform_0(%arg0: i32, %arg1: i32) -> (i32, i32) {
    %c1_i32 = arith.constant 1 : i32
    %0 = arith.muli %arg0, %c1_i32 : i32
    %1 = arith.addi %0, %arg1 : i32
    %c0_i32 = arith.constant 0 : i32
    %2 = arith.minsi %1, %c0_i32 : i32
    %c0_i32_0 = arith.constant 0 : i32
    %c0_i32_1 = arith.constant 0 : i32
    return %2, %c0_i32_0 : i32, i32
  }
  func.func @transform_1(%arg0: i32, %arg1: i32) -> (i32, i32) {
    %c1_i32 = arith.constant 1 : i32
    %0 = arith.muli %arg0, %c1_i32 : i32
    %1 = arith.addi %0, %arg1 : i32
    %c0_i32 = arith.constant 0 : i32
    %2 = arith.minsi %1, %c0_i32 : i32
    %c0_i32_0 = arith.constant 0 : i32
    %c0_i32_1 = arith.constant 0 : i32
    return %2, %c0_i32_0 : i32, i32
  }
  func.func @transform_2(%arg0: i32, %arg1: i32) -> (i32, i32, i32, i32) {
    %c0_i32 = arith.constant 0 : i32
    %c0_i32_0 = arith.constant 0 : i32
    %c0_i32_1 = arith.constant 0 : i32
    %c0_i32_2 = arith.constant 0 : i32
    return %arg0, %c0_i32, %c0_i32_0, %c0_i32_1 : i32, i32, i32, i32
  }
}

</mosaic_0001>

<llo_original>
// kernel: tpu_custom_call.1
$region0: #{tpu_custom_call.1}
  #allocation0 [shape = 'u32[]', space=smem, size = 0x4, offset = 0x4, fixed_abs, tag = 'smem constant byte address 0x4 - core index']
  #allocation1 [shape = 'u32[144,128]{1,0:T(1,128)}', space=vmem, size = 0x12000, scoped, tag = 'internal scratch']
  %s0 = inlined_call_operand.hbm [shape: f32[16,128], index: 0, kind: input, shape index: {}]
  %s1 = inlined_call_operand.hbm [shape: f32[16,128], index: 1, kind: input, shape index: {}]
  %s2 = inlined_call_operand.hbm [shape: f32[1,5,8,128], index: 2, kind: output, shape index: {}]
  %s3 = sld [smem:[#allocation0]]
  $region38: #{tpu_custom_call.1} parent=0
    _
  %s5 = ssub.s32 1, %s3
  %s6 = scalar_select 0, %s5, %s3
  $region1: #{tpu_custom_call.1} parent=0
    #allocation2 [shape = 'u8[131072]{0}', space=vmem, size = 0x20000, scoped, tag = 'input window, operand 0, single buffered']
    #allocation3 [shape = 's32[1]{0}', space=sflag, size = 0x4, scoped, tag = 'scoped memory for tpu_custom_call.1']
    #allocation4 [shape = 's32[1]{0}', space=sflag, size = 0x4, scoped, tag = 'scoped memory for tpu_custom_call.1']
    #allocation5 [shape = 'u8[131072]{0}', space=vmem, size = 0x20000, scoped, tag = 'input window, operand 1, single buffered']
    #allocation6 [shape = 's32[1]{0}', space=sflag, size = 0x4, scoped, tag = 'scoped memory for tpu_custom_call.1']
    #allocation7 [shape = 'u8[20480]{0}', space=vmem, size = 0x5000, scoped, tag = 'output window, operand 0, single buffered']
    %7 = vsyncpa [#allocation3], 0
    %8 = vsyncpa [#allocation6], 0
    %9 = vsyncpa [#allocation4], 0
    // Predicated region
    $region2: #{tpu_custom_call.1} parent=1 // pred_check
      _
    $region3: #{tpu_custom_call.1} parent=1 // pred_check_branch
      %11 = sbr.rel (0) target = $region5
    $region4: #{tpu_custom_call.1} parent=1 // pred_region
      %s12 = sadd.s32 0, 0
      %p13 = scmp.lt.s32.totalorder %s12, 0
      %s14 = scalar_select %p13, %s12, 0
      %s15 = smul.u32 32, %s14
      %s16 = ssub.s32 2, %s15
      %s17 = smul.u32 128, %s16
      %s19 = ssub.s32 4096, %s17
      %20 = vsyncadd [#allocation3], %s19
      %p21 = scmp.ne.s32.totalorder 0, %s17
      %s22 = smul.addr %s15, 128
      %s23 = scalar_lea.hbm %s0, %s22
      %s24 = smul.u32 8, %s16
      %s25 = sshll.u32 [#allocation2], 4
      %s26 = int_to_ptr.vmem [resolvable:$true] %s25
      %s27 = sshll.u32 %s24, 4
      %31 = dma.hbm_to_vmem [thread:$0]  (%p21), %s23, %s27, %s26, [#allocation3], 128, 128, 8
    $region5: #{tpu_custom_call.1} parent=1 // pred_fallthru
      _
    // Predicated region
    $region6: #{tpu_custom_call.1} parent=1 // pred_check
      _
    $region7: #{tpu_custom_call.1} parent=1 // pred_check_branch
      %33 = sbr.rel (0) target = $region9
    $region8: #{tpu_custom_call.1} parent=1 // pred_region
      %s34 = sadd.s32 0, 0
      %p35 = scmp.lt.s32.totalorder %s34, 0
      %s36 = scalar_select %p35, %s34, 0
      %s37 = smul.u32 32, %s36
      %s38 = ssub.s32 2, %s37
      %s39 = smul.u32 128, %s38
      %s41 = ssub.s32 4096, %s39
      %42 = vsyncadd [#allocation6], %s41
      %p43 = scmp.ne.s32.totalorder 0, %s39
      %s44 = smul.addr %s37, 128
      %s45 = scalar_lea.hbm %s1, %s44
      %s46 = smul.u32 8, %s38
      %s47 = sshll.u32 [#allocation5], 4
      %s48 = int_to_ptr.vmem [resolvable:$true] %s47
      %s49 = sshll.u32 %s46, 4
      %53 = dma.hbm_to_vmem [thread:$0]  (%p43), %s45, %s49, %s48, [#allocation6], 128, 128, 8
    $region9: #{tpu_custom_call.1} parent=1 // pred_fallthru
      _
    // Predicated region
    $region10: #{tpu_custom_call.1} parent=1 // pred_check
      _
    $region11: #{tpu_custom_call.1} parent=1 // pred_check_branch
      %55 = sbr.rel (0) target = $region13
    $region12: #{tpu_custom_call.1} parent=1 // pred_region
      %56 = dma.done [#allocation3], 4096
    $region13: #{tpu_custom_call.1} parent=1 // pred_fallthru
      _
    // Predicated region
    $region14: #{tpu_custom_call.1} parent=1 // pred_check
      _
    $region15: #{tpu_custom_call.1} parent=1 // pred_check_branch
      %58 = sbr.rel (0) target = $region17
    $region16: #{tpu_custom_call.1} parent=1 // pred_region
      %59 = dma.done [#allocation6], 4096
    $region17: #{tpu_custom_call.1} parent=1 // pred_fallthru
      _
    %s60 = sadd.s32 0, 0
    %p61 = scmp.lt.s32.totalorder %s60, 0
    %s62 = scalar_select %p61, %s60, 0
    %s63 = smul.u32 32, %s62
    %s64 = ssub.s32 2, %s63
    %s65 = smul.u32 128, %s64
    %s66 = sadd.s32 0, 0
    %p67 = scmp.lt.s32.totalorder %s66, 0
    %s68 = scalar_select %p67, %s66, 0
    %s69 = smul.u32 32, %s68
    %s70 = ssub.s32 2, %s69
    %s71 = smul.u32 128, %s70
    %s72 = sadd.s32 0, 0
    %p73 = scmp.eq.s32.totalorder 0, 0
    // Predicated region
    $region18: #{tpu_custom_call.1} parent=1 // pred_check
      %p74 = pneg %p73
    $region19: #{tpu_custom_call.1} parent=1 // pred_check_branch
      %76 = sbr.rel (%p74) target = $region21
    $region20: #{tpu_custom_call.1} parent=1 // pred_region
      %77 = vst [vmem:[#allocation7] sm:$0xff] 0.0
      %78 = vst [vmem:[#allocation7 + $0x8] sm:$0xff] 0.0
      %79 = vst [vmem:[#allocation7 + $0x10] sm:$0xff] 0.0
      %80 = vst [vmem:[#allocation7 + $0x18] sm:$0xff] 0.0
      %81 = vst [vmem:[#allocation7 + $0x20] sm:$0xff] 0.0
    $region21: #{tpu_custom_call.1} parent=1 // pred_fallthru
      _
    %p82 = scmp.lt.s32.totalorder %s72, 0
    // Predicated region
    $region22: #{tpu_custom_call.1} parent=1 // pred_check
      %p83 = pneg %p82
    $region23: #{tpu_custom_call.1} parent=1 // pred_check_branch
      %85 = sbr.rel (%p83) target = $region25
    $region24: #{tpu_custom_call.1} parent=1 // pred_region
      %v86 = vld [vmem:[#allocation5] sm:$0xff]
      %v87 = vld [vmem:[#allocation5 + $0x8] sm:$0xff]
      %v88 = vld [vmem:[#allocation5 + $0x10] sm:$0xff]
      %v89 = vld [vmem:[#allocation5 + $0x18] sm:$0xff]
      %v90 = vld [vmem:[#allocation5 + $0x20] sm:$0xff]
      %v91 = vld [vmem:[#allocation5 + $0x28] sm:$0xff]
      %v92 = vld [vmem:[#allocation5 + $0x30] sm:$0xff]
      %v93 = vld [vmem:[#allocation5 + $0x38] sm:$0xff]
      %v94 = vld [vmem:[#allocation5 + $0x40] sm:$0xff]
      %v95 = vld [vmem:[#allocation5 + $0x48] sm:$0xff]
      %v96 = vld [vmem:[#allocation5 + $0x50] sm:$0xff]
      %v97 = vld [vmem:[#allocation5 + $0x58] sm:$0xff]
      %v98 = vld [vmem:[#allocation5 + $0x60] sm:$0xff]
      %v99 = vld [vmem:[#allocation5 + $0x68] sm:$0xff]
      %v100 = vld [vmem:[#allocation5 + $0x70] sm:$0xff]
      %v101 = vld [vmem:[#allocation5 + $0x78] sm:$0xff]
      %v102 = vld [vmem:[#allocation5 + $0x80] sm:$0xff]
      %v103 = vld [vmem:[#allocation5 + $0x88] sm:$0xff]
      %v104 = vld [vmem:[#allocation5 + $0x90] sm:$0xff]
      %v105 = vld [vmem:[#allocation5 + $0x98] sm:$0xff]
      %v106 = vld [vmem:[#allocation5 + $0xa0] sm:$0xff]
      %v107 = vld [vmem:[#allocation5 + $0xa8] sm:$0xff]
      %v108 = vld [vmem:[#allocation5 + $0xb0] sm:$0xff]
      %v109 = vld [vmem:[#allocation5 + $0xb8] sm:$0xff]
      %v110 = vld [vmem:[#allocation5 + $0xc0] sm:$0xff]
      %v111 = vld [vmem:[#allocation5 + $0xc8] sm:$0xff]
      %v112 = vld [vmem:[#allocation5 + $0xd0] sm:$0xff]
      %v113 = vld [vmem:[#allocation5 + $0xd8] sm:$0xff]
      %v114 = vld [vmem:[#allocation5 + $0xe0] sm:$0xff]
      %v115 = vld [vmem:[#allocation5 + $0xe8] sm:$0xff]
      %v116 = vld [vmem:[#allocation5 + $0xf0] sm:$0xff]
      %v117 = vld [vmem:[#allocation5 + $0xf8] sm:$0xff]
      %v118 = vld [vmem:[#allocation2] sm:$0xff]
      %v119 = vld [vmem:[#allocation2 + $0x8] sm:$0xff]
      %v120 = vld [vmem:[#allocation2 + $0x10] sm:$0xff]
      %v121 = vld [vmem:[#allocation2 + $0x18] sm:$0xff]
      %v122 = vld [vmem:[#allocation2 + $0x20] sm:$0xff]
      %v123 = vld [vmem:[#allocation2 + $0x28] sm:$0xff]
      %v124 = vld [vmem:[#allocation2 + $0x30] sm:$0xff]
      %v125 = vld [vmem:[#allocation2 + $0x38] sm:$0xff]
      %v126 = vld [vmem:[#allocation2 + $0x40] sm:$0xff]
      %v127 = vld [vmem:[#allocation2 + $0x48] sm:$0xff]
      %v128 = vld [vmem:[#allocation2 + $0x50] sm:$0xff]
      %v129 = vld [vmem:[#allocation2 + $0x58] sm:$0xff]
      %v130 = vld [vmem:[#allocation2 + $0x60] sm:$0xff]
      %v131 = vld [vmem:[#allocation2 + $0x68] sm:$0xff]
      %v132 = vld [vmem:[#allocation2 + $0x70] sm:$0xff]
      %v133 = vld [vmem:[#allocation2 + $0x78] sm:$0xff]
      %v134 = vld [vmem:[#allocation2 + $0x80] sm:$0xff]
      %v135 = vld [vmem:[#allocation2 + $0x88] sm:$0xff]
      %v136 = vld [vmem:[#allocation2 + $0x90] sm:$0xff]
      %v137 = vld [vmem:[#allocation2 + $0x98] sm:$0xff]
      %v138 = vld [vmem:[#allocation2 + $0xa0] sm:$0xff]
      %v139 = vld [vmem:[#allocation2 + $0xa8] sm:$0xff]
      %v140 = vld [vmem:[#allocation2 + $0xb0] sm:$0xff]
      %v141 = vld [vmem:[#allocation2 + $0xb8] sm:$0xff]
      %v142 = vld [vmem:[#allocation2 + $0xc0] sm:$0xff]
      %v143 = vld [vmem:[#allocation2 + $0xc8] sm:$0xff]
      %v144 = vld [vmem:[#allocation2 + $0xd0] sm:$0xff]
      %v145 = vld [vmem:[#allocation2 + $0xd8] sm:$0xff]
      %v146 = vld [vmem:[#allocation2 + $0xe0] sm:$0xff]
      %v147 = vld [vmem:[#allocation2 + $0xe8] sm:$0xff]
      %v148 = vld [vmem:[#allocation2 + $0xf0] sm:$0xff]
      %v149 = vld [vmem:[#allocation2 + $0xf8] sm:$0xff]
      %v150 = vadd.f32 %v86, %v87
      %v151 = vadd.f32 %v150, %v88
      %v152 = vadd.f32 %v151, %v89
      %v153 = vadd.f32 %v152, %v90
      %v154 = vadd.f32 %v153, %v91
      %v155 = vadd.f32 %v154, %v92
      %v156 = vadd.f32 %v155, %v93
      %v157 = vadd.f32 %v156, %v94
      %v158 = vadd.f32 %v157, %v95
      %v159 = vadd.f32 %v158, %v96
      %v160 = vadd.f32 %v159, %v97
      %v161 = vadd.f32 %v160, %v98
      %v162 = vadd.f32 %v161, %v99
      %v163 = vadd.f32 %v162, %v100
      %v164 = vadd.f32 %v163, %v101
      %v165 = vadd.f32 %v164, %v102
      %v166 = vadd.f32 %v165, %v103
      %v167 = vadd.f32 %v166, %v104
      %v168 = vadd.f32 %v167, %v105
      %v169 = vadd.f32 %v168, %v106
      %v170 = vadd.f32 %v169, %v107
      %v171 = vadd.f32 %v170, %v108
      %v172 = vadd.f32 %v171, %v109
      %v173 = vadd.f32 %v172, %v110
      %v174 = vadd.f32 %v173, %v111
      %v175 = vadd.f32 %v174, %v112
      %v176 = vadd.f32 %v175, %v113
      %v177 = vadd.f32 %v176, %v114
      %v178 = vadd.f32 %v177, %v115
      %v179 = vadd.f32 %v178, %v116
      %v180 = vadd.f32 %v179, %v117
      %v181 = vadd.f32 %v180, 0.0
      %v182 = vadd.f32 %v118, %v119
      %v183 = vadd.f32 %v182, %v120
      %v184 = vadd.f32 %v183, %v121
      %v185 = vadd.f32 %v184, %v122
      %v186 = vadd.f32 %v185, %v123
      %v187 = vadd.f32 %v186, %v124
      %v188 = vadd.f32 %v187, %v125
      %v189 = vadd.f32 %v188, %v126
      %v190 = vadd.f32 %v189, %v127
      %v191 = vadd.f32 %v190, %v128
      %v192 = vadd.f32 %v191, %v129
      %v193 = vadd.f32 %v192, %v130
      %v194 = vadd.f32 %v193, %v131
      %v195 = vadd.f32 %v194, %v132
      %v196 = vadd.f32 %v195, %v133
      %v197 = vadd.f32 %v196, %v134
      %v198 = vadd.f32 %v197, %v135
      %v199 = vadd.f32 %v198, %v136
      %v200 = vadd.f32 %v199, %v137
      %v201 = vadd.f32 %v200, %v138
      %v202 = vadd.f32 %v201, %v139
      %v203 = vadd.f32 %v202, %v140
      %v204 = vadd.f32 %v203, %v141
      %v205 = vadd.f32 %v204, %v142
      %v206 = vadd.f32 %v205, %v143
      %v207 = vadd.f32 %v206, %v144
      %v208 = vadd.f32 %v207, %v145
      %v209 = vadd.f32 %v208, %v146
      %v210 = vadd.f32 %v209, %v147
      %v211 = vadd.f32 %v210, %v148
      %v212 = vadd.f32 %v211, %v149
      %v213 = vadd.f32 %v212, 0.0
      %v214 = vmul.f32 %v86, %v86
      %v215 = vmul.f32 %v87, %v87
      %v216 = vmul.f32 %v88, %v88
      %v217 = vmul.f32 %v89, %v89
      %v218 = vmul.f32 %v90, %v90
      %v219 = vmul.f32 %v91, %v91
      %v220 = vmul.f32 %v92, %v92
      %v221 = vmul.f32 %v93, %v93
      %v222 = vmul.f32 %v94, %v94
      %v223 = vmul.f32 %v95, %v95
      %v224 = vmul.f32 %v96, %v96
      %v225 = vmul.f32 %v97, %v97
      %v226 = vmul.f32 %v98, %v98
      %v227 = vmul.f32 %v99, %v99
      %v228 = vmul.f32 %v100, %v100
      %v229 = vmul.f32 %v101, %v101
      %v230 = vmul.f32 %v102, %v102
      %v231 = vmul.f32 %v103, %v103
      %v232 = vmul.f32 %v104, %v104
      %v233 = vmul.f32 %v105, %v105
      %v234 = vmul.f32 %v106, %v106
      %v235 = vmul.f32 %v107, %v107
      %v236 = vmul.f32 %v108, %v108
      %v237 = vmul.f32 %v109, %v109
      %v238 = vmul.f32 %v110, %v110
      %v239 = vmul.f32 %v111, %v111
      %v240 = vmul.f32 %v112, %v112
      %v241 = vmul.f32 %v113, %v113
      %v242 = vmul.f32 %v114, %v114
      %v243 = vmul.f32 %v115, %v115
      %v244 = vmul.f32 %v116, %v116
      %v245 = vmul.f32 %v117, %v117
      %v246 = vadd.f32 %v214, %v215
      %v247 = vadd.f32 %v246, %v216
      %v248 = vadd.f32 %v247, %v217
      %v249 = vadd.f32 %v248, %v218
      %v250 = vadd.f32 %v249, %v219
      %v251 = vadd.f32 %v250, %v220
      %v252 = vadd.f32 %v251, %v221
      %v253 = vadd.f32 %v252, %v222
      %v254 = vadd.f32 %v253, %v223
      %v255 = vadd.f32 %v254, %v224
      %v256 = vadd.f32 %v255, %v225
      %v257 = vadd.f32 %v256, %v226
      %v258 = vadd.f32 %v257, %v227
      %v259 = vadd.f32 %v258, %v228
      %v260 = vadd.f32 %v259, %v229
      %v261 = vadd.f32 %v260, %v230
      %v262 = vadd.f32 %v261, %v231
      %v263 = vadd.f32 %v262, %v232
      %v264 = vadd.f32 %v263, %v233
      %v265 = vadd.f32 %v264, %v234
      %v266 = vadd.f32 %v265, %v235
      %v267 = vadd.f32 %v266, %v236
      %v268 = vadd.f32 %v267, %v237
      %v269 = vadd.f32 %v268, %v238
      %v270 = vadd.f32 %v269, %v239
      %v271 = vadd.f32 %v270, %v240
      %v272 = vadd.f32 %v271, %v241
      %v273 = vadd.f32 %v272, %v242
      %v274 = vadd.f32 %v273, %v243
      %v275 = vadd.f32 %v274, %v244
      %v276 = vadd.f32 %v275, %v245
      %v277 = vadd.f32 %v276, 0.0
      %v278 = vmul.f32 %v118, %v118
      %v279 = vmul.f32 %v119, %v119
      %v280 = vmul.f32 %v120, %v120
      %v281 = vmul.f32 %v121, %v121
      %v282 = vmul.f32 %v122, %v122
      %v283 = vmul.f32 %v123, %v123
      %v284 = vmul.f32 %v124, %v124
      %v285 = vmul.f32 %v125, %v125
      %v286 = vmul.f32 %v126, %v126
      %v287 = vmul.f32 %v127, %v127
      %v288 = vmul.f32 %v128, %v128
      %v289 = vmul.f32 %v129, %v129
      %v290 = vmul.f32 %v130, %v130
      %v291 = vmul.f32 %v131, %v131
      %v292 = vmul.f32 %v132, %v132
      %v293 = vmul.f32 %v133, %v133
      %v294 = vmul.f32 %v134, %v134
      %v295 = vmul.f32 %v135, %v135
      %v296 = vmul.f32 %v136, %v136
      %v297 = vmul.f32 %v137, %v137
      %v298 = vmul.f32 %v138, %v138
      %v299 = vmul.f32 %v139, %v139
      %v300 = vmul.f32 %v140, %v140
      %v301 = vmul.f32 %v141, %v141
      %v302 = vmul.f32 %v142, %v142
      %v303 = vmul.f32 %v143, %v143
      %v304 = vmul.f32 %v144, %v144
      %v305 = vmul.f32 %v145, %v145
      %v306 = vmul.f32 %v146, %v146
      %v307 = vmul.f32 %v147, %v147
      %v308 = vmul.f32 %v148, %v148
      %v309 = vmul.f32 %v149, %v149
      %v310 = vadd.f32 %v278, %v279
      %v311 = vadd.f32 %v310, %v280
      %v312 = vadd.f32 %v311, %v281
      %v313 = vadd.f32 %v312, %v282
      %v314 = vadd.f32 %v313, %v283
      %v315 = vadd.f32 %v314, %v284
      %v316 = vadd.f32 %v315, %v285
      %v317 = vadd.f32 %v316, %v286
      %v318 = vadd.f32 %v317, %v287
      %v319 = vadd.f32 %v318, %v288
      %v320 = vadd.f32 %v319, %v289
      %v321 = vadd.f32 %v320, %v290
      %v322 = vadd.f32 %v321, %v291
      %v323 = vadd.f32 %v322, %v292
      %v324 = vadd.f32 %v323, %v293
      %v325 = vadd.f32 %v324, %v294
      %v326 = vadd.f32 %v325, %v295
      %v327 = vadd.f32 %v326, %v296
      %v328 = vadd.f32 %v327, %v297
      %v329 = vadd.f32 %v328, %v298
      %v330 = vadd.f32 %v329, %v299
      %v331 = vadd.f32 %v330, %v300
      %v332 = vadd.f32 %v331, %v301
      %v333 = vadd.f32 %v332, %v302
      %v334 = vadd.f32 %v333, %v303
      %v335 = vadd.f32 %v334, %v304
      %v336 = vadd.f32 %v335, %v305
      %v337 = vadd.f32 %v336, %v306
      %v338 = vadd.f32 %v337, %v307
      %v339 = vadd.f32 %v338, %v308
      %v340 = vadd.f32 %v339, %v309
      %v341 = vadd.f32 %v340, 0.0
      %v342 = vmul.f32 %v86, %v118
      %v343 = vmul.f32 %v87, %v119
      %v344 = vmul.f32 %v88, %v120
      %v345 = vmul.f32 %v89, %v121
      %v346 = vmul.f32 %v90, %v122
      %v347 = vmul.f32 %v91, %v123
      %v348 = vmul.f32 %v92, %v124
      %v349 = vmul.f32 %v93, %v125
      %v350 = vmul.f32 %v94, %v126
      %v351 = vmul.f32 %v95, %v127
      %v352 = vmul.f32 %v96, %v128
      %v353 = vmul.f32 %v97, %v129
      %v354 = vmul.f32 %v98, %v130
      %v355 = vmul.f32 %v99, %v131
      %v356 = vmul.f32 %v100, %v132
      %v357 = vmul.f32 %v101, %v133
      %v358 = vmul.f32 %v102, %v134
      %v359 = vmul.f32 %v103, %v135
      %v360 = vmul.f32 %v104, %v136
      %v361 = vmul.f32 %v105, %v137
      %v362 = vmul.f32 %v106, %v138
      %v363 = vmul.f32 %v107, %v139
      %v364 = vmul.f32 %v108, %v140
      %v365 = vmul.f32 %v109, %v141
      %v366 = vmul.f32 %v110, %v142
      %v367 = vmul.f32 %v111, %v143
      %v368 = vmul.f32 %v112, %v144
      %v369 = vmul.f32 %v113, %v145
      %v370 = vmul.f32 %v114, %v146
      %v371 = vmul.f32 %v115, %v147
      %v372 = vmul.f32 %v116, %v148
      %v373 = vmul.f32 %v117, %v149
      %v374 = vadd.f32 %v342, %v343
      %v375 = vadd.f32 %v374, %v344
      %v376 = vadd.f32 %v375, %v345
      %v377 = vadd.f32 %v376, %v346
      %v378 = vadd.f32 %v377, %v347
      %v379 = vadd.f32 %v378, %v348
      %v380 = vadd.f32 %v379, %v349
      %v381 = vadd.f32 %v380, %v350
      %v382 = vadd.f32 %v381, %v351
      %v383 = vadd.f32 %v382, %v352
      %v384 = vadd.f32 %v383, %v353
      %v385 = vadd.f32 %v384, %v354
      %v386 = vadd.f32 %v385, %v355
      %v387 = vadd.f32 %v386, %v356
      %v388 = vadd.f32 %v387, %v357
      %v389 = vadd.f32 %v388, %v358
      %v390 = vadd.f32 %v389, %v359
      %v391 = vadd.f32 %v390, %v360
      %v392 = vadd.f32 %v391, %v361
      %v393 = vadd.f32 %v392, %v362
      %v394 = vadd.f32 %v393, %v363
      %v395 = vadd.f32 %v394, %v364
      %v396 = vadd.f32 %v395, %v365
      %v397 = vadd.f32 %v396, %v366
      %v398 = vadd.f32 %v397, %v367
      %v399 = vadd.f32 %v398, %v368
      %v400 = vadd.f32 %v399, %v369
      %v401 = vadd.f32 %v400, %v370
      %v402 = vadd.f32 %v401, %v371
      %v403 = vadd.f32 %v402, %v372
      %v404 = vadd.f32 %v403, %v373
      %v405 = vadd.f32 %v404, 0.0
      %v406 = vld [vmem:[#allocation7] sm:$0xff]
      %v407 = vadd.f32 %v406, %v181
      %408 = vst [vmem:[#allocation7] sm:$0xff] %v407
      %s409 = scalar_lea.vmem [#allocation7], 8
      %v410 = vld [vmem:[%s409] sm:$0xff]
      %v411 = vadd.f32 %v410, %v213
      %412 = vst [vmem:[%s409] sm:$0xff] %v411
      %s413 = scalar_lea.vmem [#allocation7], 16
      %v414 = vld [vmem:[%s413] sm:$0xff]
      %v415 = vadd.f32 %v414, %v277
      %416 = vst [vmem:[%s413] sm:$0xff] %v415
      %s417 = scalar_lea.vmem [#allocation7], 24
      %v418 = vld [vmem:[%s417] sm:$0xff]
      %v419 = vadd.f32 %v418, %v341
      %420 = vst [vmem:[%s417] sm:$0xff] %v419
      %s421 = scalar_lea.vmem [#allocation7], 32
      %v422 = vld [vmem:[%s421] sm:$0xff]
      %v423 = vadd.f32 %v422, %v405
      %424 = vst [vmem:[%s421] sm:$0xff] %v423
    $region25: #{tpu_custom_call.1} parent=1 // pred_fallthru
      _
    %p425 = scmp.eq.s32.totalorder %s72, 0
    // Predicated region
    $region26: #{tpu_custom_call.1} parent=1 // pred_check
      %p426 = pneg %p425
    $region27: #{tpu_custom_call.1} parent=1 // pred_check_branch
      %428 = sbr.rel (%p426) target = $region29
    $region28: #{tpu_custom_call.1} parent=1 // pred_region
      %v429 = vld [vmem:[#allocation5] sm:$0xff]
      %v430 = vld [vmem:[#allocation5 + $0x8] sm:$0xff]
      %v431 = vld [vmem:[#allocation5 + $0x10] sm:$0xff]
      %v432 = vld [vmem:[#allocation5 + $0x18] sm:$0xff]
      %v433 = vld [vmem:[#allocation5 + $0x20] sm:$0xff]
      %v434 = vld [vmem:[#allocation5 + $0x28] sm:$0xff]
      %v435 = vld [vmem:[#allocation5 + $0x30] sm:$0xff]
      %v436 = vld [vmem:[#allocation5 + $0x38] sm:$0xff]
      %v437 = vld [vmem:[#allocation5 + $0x40] sm:$0xff]
      %v438 = vld [vmem:[#allocation5 + $0x48] sm:$0xff]
      %v439 = vld [vmem:[#allocation5 + $0x50] sm:$0xff]
      %v440 = vld [vmem:[#allocation5 + $0x58] sm:$0xff]
      %v441 = vld [vmem:[#allocation5 + $0x60] sm:$0xff]
      %v442 = vld [vmem:[#allocation5 + $0x68] sm:$0xff]
      %v443 = vld [vmem:[#allocation5 + $0x70] sm:$0xff]
      %v444 = vld [vmem:[#allocation5 + $0x78] sm:$0xff]
      %v445 = vld [vmem:[#allocation5 + $0x80] sm:$0xff]
      %v446 = vld [vmem:[#allocation5 + $0x88] sm:$0xff]
      %v447 = vld [vmem:[#allocation5 + $0x90] sm:$0xff]
      %v448 = vld [vmem:[#allocation5 + $0x98] sm:$0xff]
      %v449 = vld [vmem:[#allocation5 + $0xa0] sm:$0xff]
      %v450 = vld [vmem:[#allocation5 + $0xa8] sm:$0xff]
      %v451 = vld [vmem:[#allocation5 + $0xb0] sm:$0xff]
      %v452 = vld [vmem:[#allocation5 + $0xb8] sm:$0xff]
      %v453 = vld [vmem:[#allocation5 + $0xc0] sm:$0xff]
      %v454 = vld [vmem:[#allocation5 + $0xc8] sm:$0xff]
      %v455 = vld [vmem:[#allocation5 + $0xd0] sm:$0xff]
      %v456 = vld [vmem:[#allocation5 + $0xd8] sm:$0xff]
      %v457 = vld [vmem:[#allocation5 + $0xe0] sm:$0xff]
      %v458 = vld [vmem:[#allocation5 + $0xe8] sm:$0xff]
      %v459 = vld [vmem:[#allocation5 + $0xf0] sm:$0xff]
      %v460 = vld [vmem:[#allocation5 + $0xf8] sm:$0xff]
      %v461 = vld [vmem:[#allocation2] sm:$0xff]
      %v462 = vld [vmem:[#allocation2 + $0x8] sm:$0xff]
      %v463 = vld [vmem:[#allocation2 + $0x10] sm:$0xff]
      %v464 = vld [vmem:[#allocation2 + $0x18] sm:$0xff]
      %v465 = vld [vmem:[#allocation2 + $0x20] sm:$0xff]
      %v466 = vld [vmem:[#allocation2 + $0x28] sm:$0xff]
      %v467 = vld [vmem:[#allocation2 + $0x30] sm:$0xff]
      %v468 = vld [vmem:[#allocation2 + $0x38] sm:$0xff]
      %v469 = vld [vmem:[#allocation2 + $0x40] sm:$0xff]
      %v470 = vld [vmem:[#allocation2 + $0x48] sm:$0xff]
      %v471 = vld [vmem:[#allocation2 + $0x50] sm:$0xff]
      %v472 = vld [vmem:[#allocation2 + $0x58] sm:$0xff]
      %v473 = vld [vmem:[#allocation2 + $0x60] sm:$0xff]
      %v474 = vld [vmem:[#allocation2 + $0x68] sm:$0xff]
      %v475 = vld [vmem:[#allocation2 + $0x70] sm:$0xff]
      %v476 = vld [vmem:[#allocation2 + $0x78] sm:$0xff]
      %v477 = vld [vmem:[#allocation2 + $0x80] sm:$0xff]
      %v478 = vld [vmem:[#allocation2 + $0x88] sm:$0xff]
      %v479 = vld [vmem:[#allocation2 + $0x90] sm:$0xff]
      %v480 = vld [vmem:[#allocation2 + $0x98] sm:$0xff]
      %v481 = vld [vmem:[#allocation2 + $0xa0] sm:$0xff]
      %v482 = vld [vmem:[#allocation2 + $0xa8] sm:$0xff]
      %v483 = vld [vmem:[#allocation2 + $0xb0] sm:$0xff]
      %v484 = vld [vmem:[#allocation2 + $0xb8] sm:$0xff]
      %v485 = vld [vmem:[#allocation2 + $0xc0] sm:$0xff]
      %v486 = vld [vmem:[#allocation2 + $0xc8] sm:$0xff]
      %v487 = vld [vmem:[#allocation2 + $0xd0] sm:$0xff]
      %v488 = vld [vmem:[#allocation2 + $0xd8] sm:$0xff]
      %v489 = vld [vmem:[#allocation2 + $0xe0] sm:$0xff]
      %v490 = vld [vmem:[#allocation2 + $0xe8] sm:$0xff]
      %v491 = vld [vmem:[#allocation2 + $0xf0] sm:$0xff]
      %v492 = vld [vmem:[#allocation2 + $0xf8] sm:$0xff]
      %v493 = vlaneseq
      %v494 = vshrl.u32 %v493, 7
      %v495 = vadd.s32 %v494, 8
      %v496 = vadd.s32 %v494, 16
      %v497 = vadd.s32 %v494, 24
      %v498 = vadd.s32 %v494, 32
      %v499 = vadd.s32 %v494, 40
      %v500 = vadd.s32 %v494, 48
      %v501 = vadd.s32 %v494, 56
      %v502 = vadd.s32 %v494, 64
      %v503 = vadd.s32 %v494, 72
      %v504 = vadd.s32 %v494, 80
      %v505 = vadd.s32 %v494, 88
      %v506 = vadd.s32 %v494, 96
      %v507 = vadd.s32 %v494, 104
      %v508 = vadd.s32 %v494, 112
      %v509 = vadd.s32 %v494, 120
      %v510 = vadd.s32 %v494, 128
      %v511 = vadd.s32 %v494, 136
      %v512 = vadd.s32 %v494, 144
      %v513 = vadd.s32 %v494, 152
      %v514 = vadd.s32 %v494, 160
      %v515 = vadd.s32 %v494, 168
      %v516 = vadd.s32 %v494, 176
      %v517 = vadd.s32 %v494, 184
      %v518 = vadd.s32 %v494, 192
      %v519 = vadd.s32 %v494, 200
      %v520 = vadd.s32 %v494, 208
      %v521 = vadd.s32 %v494, 216
      %v522 = vadd.s32 %v494, 224
      %v523 = vadd.s32 %v494, 232
      %v524 = vadd.s32 %v494, 240
      %v525 = vadd.s32 %v494, 248
      %s526 = smul.u32 %s72, 256
      %v527 = vstv %s526
      %v528 = vadd.s32 %v494, %v527
      %v529 = vadd.s32 %v495, %v527
      %v530 = vadd.s32 %v496, %v527
      %v531 = vadd.s32 %v497, %v527
      %v532 = vadd.s32 %v498, %v527
      %v533 = vadd.s32 %v499, %v527
      %v534 = vadd.s32 %v500, %v527
      %v535 = vadd.s32 %v501, %v527
      %v536 = vadd.s32 %v502, %v527
      %v537 = vadd.s32 %v503, %v527
      %v538 = vadd.s32 %v504, %v527
      %v539 = vadd.s32 %v505, %v527
      %v540 = vadd.s32 %v506, %v527
      %v541 = vadd.s32 %v507, %v527
      %v542 = vadd.s32 %v508, %v527
      %v543 = vadd.s32 %v509, %v527
      %v544 = vadd.s32 %v510, %v527
      %v545 = vadd.s32 %v511, %v527
      %v546 = vadd.s32 %v512, %v527
      %v547 = vadd.s32 %v513, %v527
      %v548 = vadd.s32 %v514, %v527
      %v549 = vadd.s32 %v515, %v527
      %v550 = vadd.s32 %v516, %v527
      %v551 = vadd.s32 %v517, %v527
      %v552 = vadd.s32 %v518, %v527
      %v553 = vadd.s32 %v519, %v527
      %v554 = vadd.s32 %v520, %v527
      %v555 = vadd.s32 %v521, %v527
      %v556 = vadd.s32 %v522, %v527
      %v557 = vadd.s32 %v523, %v527
      %v558 = vadd.s32 %v524, %v527
      %v559 = vadd.s32 %v525, %v527
      %vm560 = vcmp.lt.s32.totalorder %v528, 16
      %vm561 = vcmp.lt.s32.totalorder %v529, 16
      %vm562 = vcmp.lt.s32.totalorder %v530, 16
      %vm563 = vcmp.lt.s32.totalorder %v531, 16
      %vm564 = vcmp.lt.s32.totalorder %v532, 16
      %vm565 = vcmp.lt.s32.totalorder %v533, 16
      %vm566 = vcmp.lt.s32.totalorder %v534, 16
      %vm567 = vcmp.lt.s32.totalorder %v535, 16
      %vm568 = vcmp.lt.s32.totalorder %v536, 16
      %vm569 = vcmp.lt.s32.totalorder %v537, 16
      %vm570 = vcmp.lt.s32.totalorder %v538, 16
      %vm571 = vcmp.lt.s32.totalorder %v539, 16
      %vm572 = vcmp.lt.s32.totalorder %v540, 16
      %vm573 = vcmp.lt.s32.totalorder %v541, 16
      %vm574 = vcmp.lt.s32.totalorder %v542, 16
      %vm575 = vcmp.lt.s32.totalorder %v543, 16
      %vm576 = vcmp.lt.s32.totalorder %v544, 16
      %vm577 = vcmp.lt.s32.totalorder %v545, 16
      %vm578 = vcmp.lt.s32.totalorder %v546, 16
      %vm579 = vcmp.lt.s32.totalorder %v547, 16
      %vm580 = vcmp.lt.s32.totalorder %v548, 16
      %vm581 = vcmp.lt.s32.totalorder %v549, 16
      %vm582 = vcmp.lt.s32.totalorder %v550, 16
      %vm583 = vcmp.lt.s32.totalorder %v551, 16
      %vm584 = vcmp.lt.s32.totalorder %v552, 16
      %vm585 = vcmp.lt.s32.totalorder %v553, 16
      %vm586 = vcmp.lt.s32.totalorder %v554, 16
      %vm587 = vcmp.lt.s32.totalorder %v555, 16
      %vm588 = vcmp.lt.s32.totalorder %v556, 16
      %vm589 = vcmp.lt.s32.totalorder %v557, 16
      %vm590 = vcmp.lt.s32.totalorder %v558, 16
      %vm591 = vcmp.lt.s32.totalorder %v559, 16
      %v592 = vsel %vm560, %v429, 0.0
      %v593 = vsel %vm561, %v430, 0.0
      %v594 = vsel %vm562, %v431, 0.0
      %v595 = vsel %vm563, %v432, 0.0
      %v596 = vsel %vm564, %v433, 0.0
      %v597 = vsel %vm565, %v434, 0.0
      %v598 = vsel %vm566, %v435, 0.0
      %v599 = vsel %vm567, %v436, 0.0
      %v600 = vsel %vm568, %v437, 0.0
      %v601 = vsel %vm569, %v438, 0.0
      %v602 = vsel %vm570, %v439, 0.0
      %v603 = vsel %vm571, %v440, 0.0
      %v604 = vsel %vm572, %v441, 0.0
      %v605 = vsel %vm573, %v442, 0.0
      %v606 = vsel %vm574, %v443, 0.0
      %v607 = vsel %vm575, %v444, 0.0
      %v608 = vsel %vm576, %v445, 0.0
      %v609 = vsel %vm577, %v446, 0.0
      %v610 = vsel %vm578, %v447, 0.0
      %v611 = vsel %vm579, %v448, 0.0
      %v612 = vsel %vm580, %v449, 0.0
      %v613 = vsel %vm581, %v450, 0.0
      %v614 = vsel %vm582, %v451, 0.0
      %v615 = vsel %vm583, %v452, 0.0
      %v616 = vsel %vm584, %v453, 0.0
      %v617 = vsel %vm585, %v454, 0.0
      %v618 = vsel %vm586, %v455, 0.0
      %v619 = vsel %vm587, %v456, 0.0
      %v620 = vsel %vm588, %v457, 0.0
      %v621 = vsel %vm589, %v458, 0.0
      %v622 = vsel %vm590, %v459, 0.0
      %v623 = vsel %vm591, %v460, 0.0
      %v624 = vsel %vm560, %v461, 0.0
      %v625 = vsel %vm561, %v462, 0.0
      %v626 = vsel %vm562, %v463, 0.0
      %v627 = vsel %vm563, %v464, 0.0
      %v628 = vsel %vm564, %v465, 0.0
      %v629 = vsel %vm565, %v466, 0.0
      %v630 = vsel %vm566, %v467, 0.0
      %v631 = vsel %vm567, %v468, 0.0
      %v632 = vsel %vm568, %v469, 0.0
      %v633 = vsel %vm569, %v470, 0.0
      %v634 = vsel %vm570, %v471, 0.0
      %v635 = vsel %vm571, %v472, 0.0
      %v636 = vsel %vm572, %v473, 0.0
      %v637 = vsel %vm573, %v474, 0.0
      %v638 = vsel %vm574, %v475, 0.0
      %v639 = vsel %vm575, %v476, 0.0
      %v640 = vsel %vm576, %v477, 0.0
      %v641 = vsel %vm577, %v478, 0.0
      %v642 = vsel %vm578, %v479, 0.0
      %v643 = vsel %vm579, %v480, 0.0
      %v644 = vsel %vm580, %v481, 0.0
      %v645 = vsel %vm581, %v482, 0.0
      %v646 = vsel %vm582, %v483, 0.0
      %v647 = vsel %vm583, %v484, 0.0
      %v648 = vsel %vm584, %v485, 0.0
      %v649 = vsel %vm585, %v486, 0.0
      %v650 = vsel %vm586, %v487, 0.0
      %v651 = vsel %vm587, %v488, 0.0
      %v652 = vsel %vm588, %v489, 0.0
      %v653 = vsel %vm589, %v490, 0.0
      %v654 = vsel %vm590, %v491, 0.0
      %v655 = vsel %vm591, %v492, 0.0
      %v656 = vadd.f32 %v592, %v593
      %v657 = vadd.f32 %v656, %v594
      %v658 = vadd.f32 %v657, %v595
      %v659 = vadd.f32 %v658, %v596
      %v660 = vadd.f32 %v659, %v597
      %v661 = vadd.f32 %v660, %v598
      %v662 = vadd.f32 %v661, %v599
      %v663 = vadd.f32 %v662, %v600
      %v664 = vadd.f32 %v663, %v601
      %v665 = vadd.f32 %v664, %v602
      %v666 = vadd.f32 %v665, %v603
      %v667 = vadd.f32 %v666, %v604
      %v668 = vadd.f32 %v667, %v605
      %v669 = vadd.f32 %v668, %v606
      %v670 = vadd.f32 %v669, %v607
      %v671 = vadd.f32 %v670, %v608
      %v672 = vadd.f32 %v671, %v609
      %v673 = vadd.f32 %v672, %v610
      %v674 = vadd.f32 %v673, %v611
      %v675 = vadd.f32 %v674, %v612
      %v676 = vadd.f32 %v675, %v613
      %v677 = vadd.f32 %v676, %v614
      %v678 = vadd.f32 %v677, %v615
      %v679 = vadd.f32 %v678, %v616
      %v680 = vadd.f32 %v679, %v617
      %v681 = vadd.f32 %v680, %v618
      %v682 = vadd.f32 %v681, %v619
      %v683 = vadd.f32 %v682, %v620
      %v684 = vadd.f32 %v683, %v621
      %v685 = vadd.f32 %v684, %v622
      %v686 = vadd.f32 %v685, %v623
      %v687 = vadd.f32 %v686, 0.0
      %v688 = vadd.f32 %v624, %v625
      %v689 = vadd.f32 %v688, %v626
      %v690 = vadd.f32 %v689, %v627
      %v691 = vadd.f32 %v690, %v628
      %v692 = vadd.f32 %v691, %v629
      %v693 = vadd.f32 %v692, %v630
      %v694 = vadd.f32 %v693, %v631
      %v695 = vadd.f32 %v694, %v632
      %v696 = vadd.f32 %v695, %v633
      %v697 = vadd.f32 %v696, %v634
      %v698 = vadd.f32 %v697, %v635
      %v699 = vadd.f32 %v698, %v636
      %v700 = vadd.f32 %v699, %v637
      %v701 = vadd.f32 %v700, %v638
      %v702 = vadd.f32 %v701, %v639
      %v703 = vadd.f32 %v702, %v640
      %v704 = vadd.f32 %v703, %v641
      %v705 = vadd.f32 %v704, %v642
      %v706 = vadd.f32 %v705, %v643
      %v707 = vadd.f32 %v706, %v644
      %v708 = vadd.f32 %v707, %v645
      %v709 = vadd.f32 %v708, %v646
      %v710 = vadd.f32 %v709, %v647
      %v711 = vadd.f32 %v710, %v648
      %v712 = vadd.f32 %v711, %v649
      %v713 = vadd.f32 %v712, %v650
      %v714 = vadd.f32 %v713, %v651
      %v715 = vadd.f32 %v714, %v652
      %v716 = vadd.f32 %v715, %v653
      %v717 = vadd.f32 %v716, %v654
      %v718 = vadd.f32 %v717, %v655
      %v719 = vadd.f32 %v718, 0.0
      %v720 = vmul.f32 %v592, %v592
      %v721 = vmul.f32 %v593, %v593
      %v722 = vmul.f32 %v594, %v594
      %v723 = vmul.f32 %v595, %v595
      %v724 = vmul.f32 %v596, %v596
      %v725 = vmul.f32 %v597, %v597
      %v726 = vmul.f32 %v598, %v598
      %v727 = vmul.f32 %v599, %v599
      %v728 = vmul.f32 %v600, %v600
      %v729 = vmul.f32 %v601, %v601
      %v730 = vmul.f32 %v602, %v602
      %v731 = vmul.f32 %v603, %v603
      %v732 = vmul.f32 %v604, %v604
      %v733 = vmul.f32 %v605, %v605
      %v734 = vmul.f32 %v606, %v606
      %v735 = vmul.f32 %v607, %v607
      %v736 = vmul.f32 %v608, %v608
      %v737 = vmul.f32 %v609, %v609
      %v738 = vmul.f32 %v610, %v610
      %v739 = vmul.f32 %v611, %v611
      %v740 = vmul.f32 %v612, %v612
      %v741 = vmul.f32 %v613, %v613
      %v742 = vmul.f32 %v614, %v614
      %v743 = vmul.f32 %v615, %v615
      %v744 = vmul.f32 %v616, %v616
      %v745 = vmul.f32 %v617, %v617
      %v746 = vmul.f32 %v618, %v618
      %v747 = vmul.f32 %v619, %v619
      %v748 = vmul.f32 %v620, %v620
      %v749 = vmul.f32 %v621, %v621
      %v750 = vmul.f32 %v622, %v622
      %v751 = vmul.f32 %v623, %v623
      %v752 = vadd.f32 %v720, %v721
      %v753 = vadd.f32 %v752, %v722
      %v754 = vadd.f32 %v753, %v723
      %v755 = vadd.f32 %v754, %v724
      %v756 = vadd.f32 %v755, %v725
      %v757 = vadd.f32 %v756, %v726
      %v758 = vadd.f32 %v757, %v727
      %v759 = vadd.f32 %v758, %v728
      %v760 = vadd.f32 %v759, %v729
      %v761 = vadd.f32 %v760, %v730
      %v762 = vadd.f32 %v761, %v731
      %v763 = vadd.f32 %v762, %v732
      %v764 = vadd.f32 %v763, %v733
      %v765 = vadd.f32 %v764, %v734
      %v766 = vadd.f32 %v765, %v735
      %v767 = vadd.f32 %v766, %v736
      %v768 = vadd.f32 %v767, %v737
      %v769 = vadd.f32 %v768, %v738
      %v770 = vadd.f32 %v769, %v739
      %v771 = vadd.f32 %v770, %v740
      %v772 = vadd.f32 %v771, %v741
      %v773 = vadd.f32 %v772, %v742
      %v774 = vadd.f32 %v773, %v743
      %v775 = vadd.f32 %v774, %v744
      %v776 = vadd.f32 %v775, %v745
      %v777 = vadd.f32 %v776, %v746
      %v778 = vadd.f32 %v777, %v747
      %v779 = vadd.f32 %v778, %v748
      %v780 = vadd.f32 %v779, %v749
      %v781 = vadd.f32 %v780, %v750
      %v782 = vadd.f32 %v781, %v751
      %v783 = vadd.f32 %v782, 0.0
      %v784 = vmul.f32 %v624, %v624
      %v785 = vmul.f32 %v625, %v625
      %v786 = vmul.f32 %v626, %v626
      %v787 = vmul.f32 %v627, %v627
      %v788 = vmul.f32 %v628, %v628
      %v789 = vmul.f32 %v629, %v629
      %v790 = vmul.f32 %v630, %v630
      %v791 = vmul.f32 %v631, %v631
      %v792 = vmul.f32 %v632, %v632
      %v793 = vmul.f32 %v633, %v633
      %v794 = vmul.f32 %v634, %v634
      %v795 = vmul.f32 %v635, %v635
      %v796 = vmul.f32 %v636, %v636
      %v797 = vmul.f32 %v637, %v637
      %v798 = vmul.f32 %v638, %v638
      %v799 = vmul.f32 %v639, %v639
      %v800 = vmul.f32 %v640, %v640
      %v801 = vmul.f32 %v641, %v641
      %v802 = vmul.f32 %v642, %v642
      %v803 = vmul.f32 %v643, %v643
      %v804 = vmul.f32 %v644, %v644
      %v805 = vmul.f32 %v645, %v645
      %v806 = vmul.f32 %v646, %v646
      %v807 = vmul.f32 %v647, %v647
      %v808 = vmul.f32 %v648, %v648
      %v809 = vmul.f32 %v649, %v649
      %v810 = vmul.f32 %v650, %v650
      %v811 = vmul.f32 %v651, %v651
      %v812 = vmul.f32 %v652, %v652
      %v813 = vmul.f32 %v653, %v653
      %v814 = vmul.f32 %v654, %v654
      %v815 = vmul.f32 %v655, %v655
      %v816 = vadd.f32 %v784, %v785
      %v817 = vadd.f32 %v816, %v786
      %v818 = vadd.f32 %v817, %v787
      %v819 = vadd.f32 %v818, %v788
      %v820 = vadd.f32 %v819, %v789
      %v821 = vadd.f32 %v820, %v790
      %v822 = vadd.f32 %v821, %v791
      %v823 = vadd.f32 %v822, %v792
      %v824 = vadd.f32 %v823, %v793
      %v825 = vadd.f32 %v824, %v794
      %v826 = vadd.f32 %v825, %v795
      %v827 = vadd.f32 %v826, %v796
      %v828 = vadd.f32 %v827, %v797
      %v829 = vadd.f32 %v828, %v798
      %v830 = vadd.f32 %v829, %v799
      %v831 = vadd.f32 %v830, %v800
      %v832 = vadd.f32 %v831, %v801
      %v833 = vadd.f32 %v832, %v802
      %v834 = vadd.f32 %v833, %v803
      %v835 = vadd.f32 %v834, %v804
      %v836 = vadd.f32 %v835, %v805
      %v837 = vadd.f32 %v836, %v806
      %v838 = vadd.f32 %v837, %v807
      %v839 = vadd.f32 %v838, %v808
      %v840 = vadd.f32 %v839, %v809
      %v841 = vadd.f32 %v840, %v810
      %v842 = vadd.f32 %v841, %v811
      %v843 = vadd.f32 %v842, %v812
      %v844 = vadd.f32 %v843, %v813
      %v845 = vadd.f32 %v844, %v814
      %v846 = vadd.f32 %v845, %v815
      %v847 = vadd.f32 %v846, 0.0
      %v848 = vmul.f32 %v592, %v624
      %v849 = vmul.f32 %v593, %v625
      %v850 = vmul.f32 %v594, %v626
      %v851 = vmul.f32 %v595, %v627
      %v852 = vmul.f32 %v596, %v628
      %v853 = vmul.f32 %v597, %v629
      %v854 = vmul.f32 %v598, %v630
      %v855 = vmul.f32 %v599, %v631
      %v856 = vmul.f32 %v600, %v632
      %v857 = vmul.f32 %v601, %v633
      %v858 = vmul.f32 %v602, %v634
      %v859 = vmul.f32 %v603, %v635
      %v860 = vmul.f32 %v604, %v636
      %v861 = vmul.f32 %v605, %v637
      %v862 = vmul.f32 %v606, %v638
      %v863 = vmul.f32 %v607, %v639
      %v864 = vmul.f32 %v608, %v640
      %v865 = vmul.f32 %v609, %v641
      %v866 = vmul.f32 %v610, %v642
      %v867 = vmul.f32 %v611, %v643
      %v868 = vmul.f32 %v612, %v644
      %v869 = vmul.f32 %v613, %v645
      %v870 = vmul.f32 %v614, %v646
      %v871 = vmul.f32 %v615, %v647
      %v872 = vmul.f32 %v616, %v648
      %v873 = vmul.f32 %v617, %v649
      %v874 = vmul.f32 %v618, %v650
      %v875 = vmul.f32 %v619, %v651
      %v876 = vmul.f32 %v620, %v652
      %v877 = vmul.f32 %v621, %v653
      %v878 = vmul.f32 %v622, %v654
      %v879 = vmul.f32 %v623, %v655
      %v880 = vadd.f32 %v848, %v849
      %v881 = vadd.f32 %v880, %v850
      %v882 = vadd.f32 %v881, %v851
      %v883 = vadd.f32 %v882, %v852
      %v884 = vadd.f32 %v883, %v853
      %v885 = vadd.f32 %v884, %v854
      %v886 = vadd.f32 %v885, %v855
      %v887 = vadd.f32 %v886, %v856
      %v888 = vadd.f32 %v887, %v857
      %v889 = vadd.f32 %v888, %v858
      %v890 = vadd.f32 %v889, %v859
      %v891 = vadd.f32 %v890, %v860
      %v892 = vadd.f32 %v891, %v861
      %v893 = vadd.f32 %v892, %v862
      %v894 = vadd.f32 %v893, %v863
      %v895 = vadd.f32 %v894, %v864
      %v896 = vadd.f32 %v895, %v865
      %v897 = vadd.f32 %v896, %v866
      %v898 = vadd.f32 %v897, %v867
      %v899 = vadd.f32 %v898, %v868
      %v900 = vadd.f32 %v899, %v869
      %v901 = vadd.f32 %v900, %v870
      %v902 = vadd.f32 %v901, %v871
      %v903 = vadd.f32 %v902, %v872
      %v904 = vadd.f32 %v903, %v873
      %v905 = vadd.f32 %v904, %v874
      %v906 = vadd.f32 %v905, %v875
      %v907 = vadd.f32 %v906, %v876
      %v908 = vadd.f32 %v907, %v877
      %v909 = vadd.f32 %v908, %v878
      %v910 = vadd.f32 %v909, %v879
      %v911 = vadd.f32 %v910, 0.0
      %v912 = vld [vmem:[#allocation7] sm:$0xff]
      %v913 = vadd.f32 %v912, %v687
      %914 = vst [vmem:[#allocation7] sm:$0xff] %v913
      %s915 = scalar_lea.vmem [#allocation7], 8
      %v916 = vld [vmem:[%s915] sm:$0xff]
      %v917 = vadd.f32 %v916, %v719
      %918 = vst [vmem:[%s915] sm:$0xff] %v917
      %s919 = scalar_lea.vmem [#allocation7], 16
      %v920 = vld [vmem:[%s919] sm:$0xff]
      %v921 = vadd.f32 %v920, %v783
      %922 = vst [vmem:[%s919] sm:$0xff] %v921
      %s923 = scalar_lea.vmem [#allocation7], 24
      %v924 = vld [vmem:[%s923] sm:$0xff]
      %v925 = vadd.f32 %v924, %v847
      %926 = vst [vmem:[%s923] sm:$0xff] %v925
      %s927 = scalar_lea.vmem [#allocation7], 32
      %v928 = vld [vmem:[%s927] sm:$0xff]
      %v929 = vadd.f32 %v928, %v911
      %930 = vst [vmem:[%s927] sm:$0xff] %v929
    $region29: #{tpu_custom_call.1} parent=1 // pred_fallthru
      _
    // Predicated region
    $region30: #{tpu_custom_call.1} parent=1 // pred_check
      _
    $region31: #{tpu_custom_call.1} parent=1 // pred_check_branch
      %932 = sbr.rel (0) target = $region33
    $region32: #{tpu_custom_call.1} parent=1 // pred_region
      %s934 = ssub.s32 640, 640
      %935 = vsyncadd [#allocation4], %s934
      %s936 = sshll.u32 [#allocation7], 4
      %s937 = int_to_ptr.vmem [resolvable:$true] %s936
      %942 = dma.vmem_to_hbm [thread:$0]  %s937, 640, %s2, [#allocation4], 128, 128, 8
    $region33: #{tpu_custom_call.1} parent=1 // pred_fallthru
      _
    // Predicated region
    $region34: #{tpu_custom_call.1} parent=1 // pred_check
      _
    $region35: #{tpu_custom_call.1} parent=1 // pred_check_branch
      %944 = sbr.rel (0) target = $region37
    $region36: #{tpu_custom_call.1} parent=1 // pred_region
      %945 = dma.done [#allocation4], 640
    $region37: #{tpu_custom_call.1} parent=1 // pred_fallthru
      _
    %946 = vsyncpa [#allocation3], 1
    %947 = vsyncpa [#allocation6], 1
    %948 = vsyncpa [#allocation4], 1

</llo_original>
